<compile_context>
chip_gen: v5e
topology: v5e:2x2
jax: 0.10.0
libtpu: 0.0.40
codegen_flags: <defaults>
</compile_context>

<pallas_src>
import jax
import jax.numpy as jnp
from jax.experimental import pallas as pl
from jax.experimental.pallas import tpu as pltpu

INPUT_SIZE = 10
HIDDEN_SIZE = 100
NUM_CLASSES = 5

HIDDEN_PAD = 128    # lane-dense hidden width (100 -> 128)
MAX_BLOCK_B = 1024  # batch tile rows; ~0.35 us/step overhead amortized


def _round_up(n, m):
    return ((n + m - 1) // m) * m


def _mlp_kernel(x_ref, w1_ref, b1_ref, w2_ref, b2_ref, o_ref):
    # In-kernel downcast of the activations for the MXU (free VPU work; saves
    # a separate wrapper-side cast pass over HBM).
    x = x_ref[...].astype(jnp.bfloat16)
    # fc1: (TB, 10) @ (10, 128), bf16 inputs -> f32 accumulation on the MXU.
    h = jnp.dot(x, w1_ref[...], preferred_element_type=jnp.float32)
    # Bias + ReLU in f32 on the lane-dense (TB, 128) tile.  Padded hidden
    # columns stay exactly zero (zero weights + zero bias -> relu(0) = 0).
    h = jnp.maximum(h + b1_ref[...], 0.0)
    # fc2: single explicit downcast of h; (TB, 128) @ (128, 5), f32 acc.
    out = jnp.dot(h.astype(jnp.bfloat16), w2_ref[...],
                  preferred_element_type=jnp.float32)
    # Compact (TB, NUM_CLASSES) store: only the useful 20 B/row go to HBM.
    o_ref[...] = (out + b2_ref[...]).astype(o_ref.dtype)


def prepare_params(w1, b1, w2, b2):
    """One-time padding / downcast of the weights into the kernel layout.

    Hoisted out of the per-call path so the forward pass is a single
    pallas_call with no extra XLA passes.
    """
    w1p = jnp.zeros((INPUT_SIZE, HIDDEN_PAD), jnp.bfloat16)
    w1p = w1p.at[:, :HIDDEN_SIZE].set(w1.astype(jnp.bfloat16))
    b1p = jnp.zeros((1, HIDDEN_PAD), jnp.float32)
    b1p = b1p.at[:, :HIDDEN_SIZE].set(
        b1.reshape(1, HIDDEN_SIZE).astype(jnp.float32))
    w2p = jnp.zeros((HIDDEN_PAD, NUM_CLASSES), jnp.bfloat16)
    w2p = w2p.at[:HIDDEN_SIZE, :].set(w2.astype(jnp.bfloat16))
    b2p = b2.reshape(1, NUM_CLASSES).astype(jnp.float32)
    return w1p, b1p, w2p, b2p


def _choose_tb(B):
    # Target at least 2 grid steps so the "parallel" batch axis can be split
    # across v7x's two TensorCores; cap the tile at MAX_BLOCK_B rows.
    if B <= 8:
        return _round_up(B, 8)
    return min(MAX_BLOCK_B, _round_up((B + 1) // 2, 8))


def net_forward(x, w1p, b1p, w2p, b2p):
    """Fused fc1 -> ReLU -> fc2 forward pass.

    Args:
      x: (B, INPUT_SIZE) float32.
      w1p/b1p/w2p/b2p: padded params from prepare_params().
    Returns:
      (B, NUM_CLASSES) float32 logits.
    """
    B = x.shape[0]
    tb = _choose_tb(B)
    grid = (pl.cdiv(B, tb),)

    return pl.pallas_call(
        _mlp_kernel,
        out_shape=jax.ShapeDtypeStruct((B, NUM_CLASSES), jnp.float32),
        grid=grid,
        in_specs=[
            # Activations: tiled along the batch grid axis, f32 in HBM.
            pl.BlockSpec((tb, INPUT_SIZE), lambda i: (i, 0)),
            # Weights / biases: constant index_map -> fetched once, VMEM-resident.
            pl.BlockSpec((INPUT_SIZE, HIDDEN_PAD), lambda i: (0, 0)),
            pl.BlockSpec((1, HIDDEN_PAD), lambda i: (0, 0)),
            pl.BlockSpec((HIDDEN_PAD, NUM_CLASSES), lambda i: (0, 0)),
            pl.BlockSpec((1, NUM_CLASSES), lambda i: (0, 0)),
        ],
        out_specs=pl.BlockSpec((tb, NUM_CLASSES), lambda i: (i, 0)),
        compiler_params=pltpu.CompilerParams(
            # Batch tiles are independent -> megacore-shardable on v7x.
            dimension_semantics=("parallel",),
        ),
    )(x, w1p, b1p, w2p, b2p)


def init_params(key):
    """Deterministic parameter init (uniform, mimicking nn.Linear fan-in scaling)."""
    k1, k2, k3, k4 = jax.random.split(key, 4)
    bound1 = 1.0 / (INPUT_SIZE ** 0.5)
    bound2 = 1.0 / (HIDDEN_SIZE ** 0.5)
    w1 = jax.random.uniform(k1, (INPUT_SIZE, HIDDEN_SIZE), jnp.float32,
                            minval=-bound1, maxval=bound1)
    b1 = jax.random.uniform(k2, (1, HIDDEN_SIZE), jnp.float32,
                            minval=-bound1, maxval=bound1)
    w2 = jax.random.uniform(k3, (HIDDEN_SIZE, NUM_CLASSES), jnp.float32,
                            minval=-bound2, maxval=bound2)
    b2 = jax.random.uniform(k4, (1, NUM_CLASSES), jnp.float32,
                            minval=-bound2, maxval=bound2)
    return w1, b1, w2, b2


if __name__ == "__main__":
    key = jax.random.PRNGKey(0)
    k_params, k_x = jax.random.split(key)

    w1, b1, w2, b2 = init_params(k_params)
    params = prepare_params(w1, b1, w2, b2)   # one-time, outside the hot path

    batch = 8
    x = jax.random.normal(k_x, (batch, INPUT_SIZE), jnp.float32)

    fwd = jax.jit(net_forward)
    out = jax.block_until_ready(fwd(x, *params))

    # Pure-JAX reference using the same bf16-input / f32-accumulate policy.
    xb = x.astype(jnp.bfloat16)
    w1b = w1.astype(jnp.bfloat16)
    w2b = w2.astype(jnp.bfloat16)
    h_ref = jnp.maximum(
        jnp.dot(xb, w1b, preferred_element_type=jnp.float32) + b1, 0.0)
    ref = jnp.dot(h_ref.astype(jnp.bfloat16), w2b,
                  preferred_element_type=jnp.float32) + b2

    assert out.shape == (batch, NUM_CLASSES)
    assert jnp.allclose(out, ref, atol=2e-2, rtol=2e-2), (
        f"max abs err {jnp.max(jnp.abs(out - ref))}")

    print("KERNEL_OK")
</pallas_src>

<mosaic_0001>
module attributes {stable_mosaic.version = 11 : i64} {
  func.func @_mlp_kernel(%arg0: i32, %arg1: memref<8x10xf32, #tpu.memory_space<vmem>>, %arg2: memref<10x128xbf16, #tpu.memory_space<vmem>>, %arg3: memref<1x128xf32, #tpu.memory_space<vmem>>, %arg4: memref<128x5xbf16, #tpu.memory_space<vmem>>, %arg5: memref<1x5xf32, #tpu.memory_space<vmem>>, %arg6: memref<8x5xf32, #tpu.memory_space<vmem>>) attributes {dimension_semantics = [#tpu.dimension_semantics<parallel>], iteration_bounds = array<i64: 1>, scalar_prefetch = 0 : i64, scratch_operands = 0 : i64, tpu.core_type = #tpu.core_type<tc>, window_params = [{transform_indices = @transform_0, window_bounds = array<i64: 8, 10>}, {pipeline_mode = #tpu.pipeline_mode<synchronous>, transform_indices = @transform_1, window_bounds = array<i64: 10, 128>}, {pipeline_mode = #tpu.pipeline_mode<synchronous>, transform_indices = @transform_2, window_bounds = array<i64: 1, 128>}, {pipeline_mode = #tpu.pipeline_mode<synchronous>, transform_indices = @transform_3, window_bounds = array<i64: 128, 5>}, {pipeline_mode = #tpu.pipeline_mode<synchronous>, transform_indices = @transform_4, window_bounds = array<i64: 1, 5>}, {transform_indices = @transform_5, window_bounds = array<i64: 8, 5>}]} {
    %c0 = arith.constant 0 : index
    %c0_0 = arith.constant 0 : index
    %0 = vector.load %arg1[%c0, %c0_0] : memref<8x10xf32, #tpu.memory_space<vmem>>, vector<8x10xf32>
    %1 = arith.truncf %0 : vector<8x10xf32> to vector<8x10xbf16>
    %c0_1 = arith.constant 0 : index
    %c0_2 = arith.constant 0 : index
    %2 = vector.load %arg2[%c0_1, %c0_2] : memref<10x128xbf16, #tpu.memory_space<vmem>>, vector<10x128xbf16>
    %cst = arith.constant dense<0.000000e+00> : vector<8x128xf32>
    %3 = tpu.matmul %1, %2, %cst {dimension_numbers = #tpu.dot_dimension_numbers<[1], [0], [0], [1], [0, 0, 1, 1], [], []>} : vector<8x10xbf16>, vector<10x128xbf16>, vector<8x128xf32> -> vector<8x128xf32>
    %c0_3 = arith.constant 0 : index
    %c0_4 = arith.constant 0 : index
    %4 = vector.load %arg3[%c0_3, %c0_4] : memref<1x128xf32, #tpu.memory_space<vmem>>, vector<1x128xf32>
    %5 = vector.broadcast %4 : vector<1x128xf32> to vector<8x128xf32>
    %6 = arith.addf %3, %5 : vector<8x128xf32>
    %cst_5 = arith.constant 0.000000e+00 : f32
    %7 = vector.broadcast %cst_5 : f32 to vector<8x128xf32>
    %8 = arith.maximumf %6, %7 : vector<8x128xf32>
    %9 = arith.truncf %8 : vector<8x128xf32> to vector<8x128xbf16>
    %c0_6 = arith.constant 0 : index
    %c0_7 = arith.constant 0 : index
    %10 = vector.load %arg4[%c0_6, %c0_7] : memref<128x5xbf16, #tpu.memory_space<vmem>>, vector<128x5xbf16>
    %cst_8 = arith.constant dense<0.000000e+00> : vector<8x5xf32>
    %11 = tpu.matmul %9, %10, %cst_8 {dimension_numbers = #tpu.dot_dimension_numbers<[1], [0], [0], [1], [0, 0, 1, 1], [], []>} : vector<8x128xbf16>, vector<128x5xbf16>, vector<8x5xf32> -> vector<8x5xf32>
    %c0_9 = arith.constant 0 : index
    %c0_10 = arith.constant 0 : index
    %12 = vector.load %arg5[%c0_9, %c0_10] : memref<1x5xf32, #tpu.memory_space<vmem>>, vector<1x5xf32>
    %13 = vector.broadcast %12 : vector<1x5xf32> to vector<8x5xf32>
    %14 = arith.addf %11, %13 : vector<8x5xf32>
    %c0_11 = arith.constant 0 : index
    %c0_12 = arith.constant 0 : index
    %15 = vector.load %arg6[%c0_11, %c0_12] : memref<8x5xf32, #tpu.memory_space<vmem>>, vector<8x5xf32>
    tpu.vector_store %arg6[%c0_11, %c0_12], %14 {strides = array<i32>} : memref<8x5xf32, #tpu.memory_space<vmem>>, vector<8x5xf32>,
    return
  }
  func.func @transform_0(%arg0: i32) -> (i32, i32) {
    %c0_i32 = arith.constant 0 : i32
    %c0_i32_0 = arith.constant 0 : i32
    return %arg0, %c0_i32 : i32, i32
  }
  func.func @transform_1(%arg0: i32) -> (i32, i32) {
    %c0_i32 = arith.constant 0 : i32
    %c0_i32_0 = arith.constant 0 : i32
    %c0_i32_1 = arith.constant 0 : i32
    return %c0_i32, %c0_i32_0 : i32, i32
  }
  func.func @transform_2(%arg0: i32) -> (i32, i32) {
    %c0_i32 = arith.constant 0 : i32
    %c0_i32_0 = arith.constant 0 : i32
    %c0_i32_1 = arith.constant 0 : i32
    return %c0_i32, %c0_i32_0 : i32, i32
  }
  func.func @transform_3(%arg0: i32) -> (i32, i32) {
    %c0_i32 = arith.constant 0 : i32
    %c0_i32_0 = arith.constant 0 : i32
    %c0_i32_1 = arith.constant 0 : i32
    return %c0_i32, %c0_i32_0 : i32, i32
  }
  func.func @transform_4(%arg0: i32) -> (i32, i32) {
    %c0_i32 = arith.constant 0 : i32
    %c0_i32_0 = arith.constant 0 : i32
    %c0_i32_1 = arith.constant 0 : i32
    return %c0_i32, %c0_i32_0 : i32, i32
  }
  func.func @transform_5(%arg0: i32) -> (i32, i32) {
    %c0_i32 = arith.constant 0 : i32
    %c0_i32_0 = arith.constant 0 : i32
    return %arg0, %c0_i32 : i32, i32
  }
}

</mosaic_0001>

<llo_original>
// kernel: net_forward.1
$region0: #{net_forward.1}
  #allocation0 [shape = 'u32[]', space=smem, size = 0x4, offset = 0x4, fixed_abs, tag = 'smem constant byte address 0x4 - core index']
  #allocation1 [shape = 'u32[72,128]{1,0:T(1,128)}', space=vmem, size = 0x9000, scoped, tag = 'internal scratch']
  %s0 = inlined_call_operand.vmem [shape: f32[8,10], index: 0, kind: input, shape index: {}]
  %s1 = inlined_call_operand.vmem [shape: bf16[10,128], index: 1, kind: input, shape index: {}]
  %s2 = inlined_call_operand.vmem [shape: f32[1,128], index: 2, kind: input, shape index: {}]
  %s3 = inlined_call_operand.vmem [shape: bf16[128,5], index: 3, kind: input, shape index: {}]
  %s4 = inlined_call_operand.vmem [shape: f32[1,5], index: 4, kind: input, shape index: {}]
  %s5 = inlined_call_operand.hbm [shape: f32[8,5], index: 5, kind: output, shape index: {}]
  %s6 = sld [smem:[#allocation0]]
  $region30: #{net_forward.1} parent=0
    _
  %s8 = ssub.s32 1, %s6
  %s9 = scalar_select 0, %s8, %s6
  $region1: #{net_forward.1} parent=0
    #allocation2 [shape = 'u8[4096]{0}', space=vmem, size = 0x1000, scoped, tag = 'output window, operand 0, single buffered']
    #allocation3 [shape = 's32[1]{0}', space=sflag, size = 0x4, scoped, tag = 'scoped memory for net_forward.1']
    %10 = vsyncpa [#allocation3], 0
    // Predicated region
    $region2: #{net_forward.1} parent=1 // pred_check
      _
    $region3: #{net_forward.1} parent=1 // pred_check_branch
      %12 = sbr.rel (0) target = $region5
    $region4: #{net_forward.1} parent=1 // pred_region
      _
    $region5: #{net_forward.1} parent=1 // pred_fallthru
      _
    // Predicated region
    $region6: #{net_forward.1} parent=1 // pred_check
      _
    $region7: #{net_forward.1} parent=1 // pred_check_branch
      %14 = sbr.rel (0) target = $region9
    $region8: #{net_forward.1} parent=1 // pred_region
      _
    $region9: #{net_forward.1} parent=1 // pred_fallthru
      _
    // Predicated region
    $region10: #{net_forward.1} parent=1 // pred_check
      _
    $region11: #{net_forward.1} parent=1 // pred_check_branch
      %16 = sbr.rel (0) target = $region13
    $region12: #{net_forward.1} parent=1 // pred_region
      _
    $region13: #{net_forward.1} parent=1 // pred_fallthru
      _
    // Predicated region
    $region14: #{net_forward.1} parent=1 // pred_check
      _
    $region15: #{net_forward.1} parent=1 // pred_check_branch
      %18 = sbr.rel (0) target = $region17
    $region16: #{net_forward.1} parent=1 // pred_region
      _
    $region17: #{net_forward.1} parent=1 // pred_fallthru
      _
    // Predicated region
    $region18: #{net_forward.1} parent=1 // pred_check
      _
    $region19: #{net_forward.1} parent=1 // pred_check_branch
      %20 = sbr.rel (0) target = $region21
    $region20: #{net_forward.1} parent=1 // pred_region
      _
    $region21: #{net_forward.1} parent=1 // pred_fallthru
      _
    %v22 = vld [vmem:[%s0] sm:$0xff]
    %v23 = vpack.c.bf16 %v22, %v22
    %v24 = vld [vmem:[%s1] sm:$0xf]
    %v25 = vld [vmem:[%s1 + $0x4] sm:$0x1]
    %v26 = vld [vmem:[%s2] sm:$0x1]
    %v28 = vperm.slane %v26, 0
    %v32 = vunpack.c.l.b16 %v24
    %v33 = vunpack.c.l.b16 %v25
    %v34 = vpack.c.b16 %v33, %v32
    %vm35 = vcmask 80896
    %v37 = vsel %vm35, %v23, 0
    %vm39 = vcmask 1044480
    %v41 = vsel %vm39, %v34, 0
    %43 = vmatpush.bf16.msra.mxu0 0
    %44 = vmatpush.bf16.msra.mxu0 0
    %45 = vmatpush.bf16.msra.mxu0 0
    %46 = vmatpush.bf16.msra.mxu0 0
    %47 = vmatpush.bf16.msra.mxu0 0
    %48 = vmatpush.bf16.msra.mxu0 0
    %49 = vmatpush.bf16.msra.mxu0 0
    %50 = vmatpush.bf16.msra.mxu0 %v41
    %51 = vmatmul.bf16.gmra.mxu0 %v37
    %v52 = vpop.f32.mrf.mxu0
    %v53 = vadd.f32 %v28, %v52
    %v54 = vpop.f32.mrf.mxu0
    %55 = vdwg.mxu0
    %v56 = vmax.f32 %v53, 0.0
    %v57 = vpack.c.bf16 %v56, %v56
    %v58 = vld [vmem:[%s3] sm:$0xf]
    %v59 = vld [vmem:[%s3 + $0x4] sm:$0xf]
    %v60 = vld [vmem:[%s3 + $0x8] sm:$0xf]
    %v61 = vld [vmem:[%s3 + $0xc] sm:$0xf]
    %v62 = vld [vmem:[%s3 + $0x10] sm:$0xf]
    %v63 = vld [vmem:[%s3 + $0x14] sm:$0xf]
    %v64 = vld [vmem:[%s3 + $0x18] sm:$0xf]
    %v65 = vld [vmem:[%s3 + $0x1c] sm:$0xf]
    %v66 = vld [vmem:[%s3 + $0x20] sm:$0xf]
    %v67 = vld [vmem:[%s3 + $0x24] sm:$0xf]
    %v68 = vld [vmem:[%s3 + $0x28] sm:$0xf]
    %v69 = vld [vmem:[%s3 + $0x2c] sm:$0xf]
    %v70 = vld [vmem:[%s3 + $0x30] sm:$0xf]
    %v71 = vld [vmem:[%s3 + $0x34] sm:$0xf]
    %v72 = vld [vmem:[%s3 + $0x38] sm:$0xf]
    %v73 = vld [vmem:[%s3 + $0x3c] sm:$0xf]
    %v74 = vld [vmem:[%s4] sm:$0x1]
    %v76 = vperm.slane %v74, 0
    %v94 = vunpack.c.l.b16 %v58
    %v95 = vunpack.c.l.b16 %v59
    %v96 = vunpack.c.l.b16 %v60
    %v97 = vunpack.c.l.b16 %v61
    %v98 = vunpack.c.l.b16 %v62
    %v99 = vunpack.c.l.b16 %v63
    %v100 = vunpack.c.l.b16 %v64
    %v101 = vunpack.c.l.b16 %v65
    %v102 = vunpack.c.l.b16 %v66
    %v103 = vunpack.c.l.b16 %v67
    %v104 = vunpack.c.l.b16 %v68
    %v105 = vunpack.c.l.b16 %v69
    %v106 = vunpack.c.l.b16 %v70
    %v107 = vunpack.c.l.b16 %v71
    %v108 = vunpack.c.l.b16 %v72
    %v109 = vunpack.c.l.b16 %v73
    %v110 = vpack.c.b16 %v95, %v94
    %v111 = vpack.c.b16 %v97, %v96
    %v112 = vpack.c.b16 %v99, %v98
    %v113 = vpack.c.b16 %v101, %v100
    %v114 = vpack.c.b16 %v103, %v102
    %v115 = vpack.c.b16 %v105, %v104
    %v116 = vpack.c.b16 %v107, %v106
    %v117 = vpack.c.b16 %v109, %v108
    %126 = vmatpush.bf16.msra.mxu0 %v117
    %127 = vmatpush.bf16.msra.mxu0 %v116
    %128 = vmatpush.bf16.msra.mxu0 %v115
    %129 = vmatpush.bf16.msra.mxu0 %v114
    %130 = vmatpush.bf16.msra.mxu0 %v113
    %131 = vmatpush.bf16.msra.mxu0 %v112
    %132 = vmatpush.bf16.msra.mxu0 %v111
    %133 = vmatpush.bf16.msra.mxu0 %v110
    %134 = vmatmul.bf16.gmra.mxu0 %v57
    %v135 = vpop.f32.mrf.mxu0
    %v136 = vadd.f32 %v76, %v135
    %v137 = vpop.f32.mrf.mxu0
    %138 = vdwg.mxu0
    %vm139 = vcmask 39936
    %140 = vst.msk [vmem:[#allocation2] sm:$0xff] %vm139, %v136
    // Predicated region
    $region22: #{net_forward.1} parent=1 // pred_check
      _
    $region23: #{net_forward.1} parent=1 // pred_check_branch
      %142 = sbr.rel (0) target = $region25
    $region24: #{net_forward.1} parent=1 // pred_region
      %144 = vsyncadd [#allocation3], 0
      %s146 = sshll.u32 [#allocation2], 4
      %s147 = int_to_ptr.vmem [resolvable:$true] %s146
      %s148 = sshll.u32 %s5, 4
      %s149 = int_to_ptr.hbm [resolvable:$true] %s148
      %151 = dma.vmem_to_hbm [thread:$0]  %s147, 128, %s149, [#allocation3]
    $region25: #{net_forward.1} parent=1 // pred_fallthru
      _
    // Predicated region
    $region26: #{net_forward.1} parent=1 // pred_check
      _
    $region27: #{net_forward.1} parent=1 // pred_check_branch
      %153 = sbr.rel (0) target = $region29
    $region28: #{net_forward.1} parent=1 // pred_region
      %155 = dma.done [#allocation3], 128
    $region29: #{net_forward.1} parent=1 // pred_fallthru
      _
    %156 = vsyncpa [#allocation3], 1

</llo_original>
